<compile_context>
chip_gen: v7x
topology: tpu7x:2x2x1
jax: 0.10.0
libtpu: 0.0.40
codegen_flags: <defaults>
</compile_context>

<pallas_src>
import functools

import jax
import jax.numpy as jnp
from jax.experimental import pallas as pl
from jax.experimental.pallas import tpu as pltpu


# ----------------------------- helpers --------------------------------------


def _round_up(x, m):
    return ((x + m - 1) // m) * m


def _choose_ti(inter, requested):
    """Largest lane-aligned intermediate tile <= requested that divides inter."""
    for cand in (1024, 768, 512, 384, 256, 128):
        if cand <= requested and inter % cand == 0:
            return cand
    return inter  # small or odd intermediate sizes: take the whole thing


def choose_tiles(m, inter, tm=256, ti=512):
    tm_eff = min(tm, _round_up(m, 8))
    ti_eff = _choose_ti(inter, ti)
    return tm_eff, ti_eff


def pack_gate_up(w_gate, w_up, ti):
    """Block-interleave gate/up columns so that the contiguous column window
    [j*2*ti, (j+1)*2*ti) holds [gate block j | up block j].  Done once,
    outside the per-step hot path (precompute for real deployments)."""
    hidden, inter = w_gate.shape
    nb = inter // ti
    assert nb * ti == inter
    packed = jnp.stack(
        [w_gate.reshape(hidden, nb, ti), w_up.reshape(hidden, nb, ti)], axis=2
    )  # (hidden, nb, 2, ti)
    return packed.reshape(hidden, 2 * inter)


# ----------------------------- kernel ---------------------------------------


def _fused_mlp_kernel(x_ref, wgu_ref, wd_ref, o_ref, acc_ref, *, ti):
    # Zero the accumulator at the start of the intermediate (reduction) axis.
    @pl.when(pl.program_id(1) == 0)
    def _():
        acc_ref[...] = jnp.zeros_like(acc_ref)

    x = x_ref[...]                                                      # (tm, H)
    # One wide matmul for gate and up together: (tm, H) @ (H, 2*ti).
    gu = jnp.dot(x, wgu_ref[...], preferred_element_type=jnp.float32)   # (tm, 2*ti)
    gate = gu[:, :ti]
    up = gu[:, ti:]
    # silu(gate) * up; exp + approximate reciprocal run on the EUP slot.
    h = gate * pl.reciprocal(1.0 + jnp.exp(-gate), approx=True) * up
    acc_ref[...] += jnp.dot(
        h.astype(wd_ref.dtype), wd_ref[...], preferred_element_type=jnp.float32
    )                                                                   # (tm, H)

    # Write out once the reduction over the intermediate axis is complete.
    @pl.when(pl.program_id(1) == pl.num_programs(1) - 1)
    def _():
        o_ref[...] = acc_ref[...].astype(o_ref.dtype)


# ----------------------------- wrappers -------------------------------------


@functools.partial(jax.jit, static_argnames=("tm", "ti"))
def fused_llama_mlp_packed(x, w_gate_up, w_down, *, tm, ti):
    """x: (batch, seq, hidden); w_gate_up: (hidden, 2*inter) block-interleaved
    (see pack_gate_up); w_down: (inter, hidden)."""
    batch, seq, hidden = x.shape
    inter = w_down.shape[0]
    assert w_gate_up.shape == (hidden, 2 * inter)
    assert inter % ti == 0

    m = batch * seq
    x2d = x.reshape(m, hidden)
    m_pad = _round_up(m, tm)
    if m_pad != m:
        x2d = jnp.pad(x2d, ((0, m_pad - m), (0, 0)))
    grid = (m_pad // tm, inter // ti)

    # VMEM budget: double-buffered input/output tiles + f32 accumulator,
    # with ~30% headroom; clamped so default tiles also fit v7x (64 MiB/TC).
    in_bytes = 2 * (
        tm * hidden * x2d.dtype.itemsize
        + hidden * 2 * ti * w_gate_up.dtype.itemsize
        + ti * hidden * w_down.dtype.itemsize
    )
    out_bytes = 2 * tm * hidden * x.dtype.itemsize
    acc_bytes = tm * hidden * 4
    vmem_limit = int(1.3 * (in_bytes + out_bytes + acc_bytes)) + (4 << 20)
    vmem_limit = max(32 << 20, min(vmem_limit, 128 << 20))

    cost = pl.CostEstimate(
        flops=6 * m_pad * hidden * inter,
        transcendentals=m_pad * inter,
        bytes_accessed=(
            m_pad * hidden * x2d.dtype.itemsize                       # x in
            + grid[0] * 2 * hidden * inter * w_gate_up.dtype.itemsize  # gate/up weights (re-streamed per M tile)
            + grid[0] * inter * hidden * w_down.dtype.itemsize         # down weights
            + m_pad * hidden * x.dtype.itemsize                        # out
        ),
    )

    out2d = pl.pallas_call(
        functools.partial(_fused_mlp_kernel, ti=ti),
        out_shape=jax.ShapeDtypeStruct((m_pad, hidden), x.dtype),
        grid_spec=pltpu.PrefetchScalarGridSpec(
            num_scalar_prefetch=0,
            grid=grid,
            in_specs=[
                pl.BlockSpec((tm, hidden), lambda i, j: (i, 0)),      # x tile
                pl.BlockSpec((hidden, 2 * ti), lambda i, j: (0, j)),  # fused gate|up slice
                pl.BlockSpec((ti, hidden), lambda i, j: (j, 0)),      # down slice
            ],
            out_specs=pl.BlockSpec((tm, hidden), lambda i, j: (i, 0)),
            scratch_shapes=[pltpu.VMEM((tm, hidden), jnp.float32)],
        ),
        compiler_params=pltpu.CompilerParams(
            dimension_semantics=("parallel", "arbitrary"),
            vmem_limit_bytes=vmem_limit,
        ),
        cost_estimate=cost,
    )(x2d, w_gate_up, w_down)

    return out2d[:m].reshape(batch, seq, hidden)


def fused_llama_mlp(x, w_gate, w_up, w_down, *, tm=256, ti=512):
    """Convenience wrapper: picks tiles, packs gate/up weights, runs kernel.
    Weights are stored (in_features, out_features), i.e. x @ W."""
    batch, seq, _ = x.shape
    inter = w_gate.shape[1]
    tm_eff, ti_eff = choose_tiles(batch * seq, inter, tm, ti)
    w_gate_up = pack_gate_up(w_gate, w_up, ti_eff)
    return fused_llama_mlp_packed(x, w_gate_up, w_down, tm=tm_eff, ti=ti_eff)


def _reference_mlp(x, w_gate, w_up, w_down):
    gate = jnp.einsum("bsh,hi->bsi", x, w_gate)
    up = jnp.einsum("bsh,hi->bsi", x, w_up)
    h = jax.nn.silu(gate) * up
    return jnp.einsum("bsi,ih->bsh", h, w_down)


# ----------------------------- demo / check ---------------------------------


if __name__ == "__main__":
    # Test 1: small f32 config consistent with the module's forward
    # (hidden_size=32, intermediate_size=256, batch=2, seq=8).
    batch, seq = 2, 8
    hidden_size, intermediate_size = 32, 256

    key = jax.random.PRNGKey(0)
    kx, kg, ku, kd = jax.random.split(key, 4)
    x = jax.random.normal(kx, (batch, seq, hidden_size), dtype=jnp.float32)
    w_gate = 0.02 * jax.random.normal(kg, (hidden_size, intermediate_size), dtype=jnp.float32)
    w_up = 0.02 * jax.random.normal(ku, (hidden_size, intermediate_size), dtype=jnp.float32)
    w_down = 0.02 * jax.random.normal(kd, (intermediate_size, hidden_size), dtype=jnp.float32)

    out = jax.block_until_ready(fused_llama_mlp(x, w_gate, w_up, w_down))
    ref = _reference_mlp(x, w_gate, w_up, w_down)
    assert out.shape == (batch, seq, hidden_size)
    rel = float(jnp.max(jnp.abs(out - ref)) / (jnp.max(jnp.abs(ref)) + 1e-12))
    assert rel < 2e-2, f"f32 mismatch vs reference: rel={rel}"

    # Test 2: bf16 path with the large-tile config (tm=256, ti=512), which is
    # what real Llama shapes use; compared against an f32 reference.
    b2, s2, h2, i2 = 2, 256, 256, 1024
    k2 = jax.random.split(jax.random.PRNGKey(0), 4)
    x2 = jax.random.normal(k2[0], (b2, s2, h2), dtype=jnp.float32)
    wg2 = 0.02 * jax.random.normal(k2[1], (h2, i2), dtype=jnp.float32)
    wu2 = 0.02 * jax.random.normal(k2[2], (h2, i2), dtype=jnp.float32)
    wd2 = 0.02 * jax.random.normal(k2[3], (i2, h2), dtype=jnp.float32)

    out2 = fused_llama_mlp(
        x2.astype(jnp.bfloat16),
        wg2.astype(jnp.bfloat16),
        wu2.astype(jnp.bfloat16),
        wd2.astype(jnp.bfloat16),
    )
    out2 = jax.block_until_ready(out2)
    ref2 = _reference_mlp(x2, wg2, wu2, wd2)
    rel2 = float(
        jnp.max(jnp.abs(out2.astype(jnp.float32) - ref2)) / (jnp.max(jnp.abs(ref2)) + 1e-12)
    )
    assert out2.shape == (b2, s2, h2)
    assert rel2 < 6e-2, f"bf16 mismatch vs reference: rel={rel2}"

    print("KERNEL_OK")
</pallas_src>

<mosaic_0001>
module attributes {stable_mosaic.version = 11 : i64} {
  func.func @_fused_mlp_kernel(%arg0: i32, %arg1: i32, %arg2: memref<16x32xf32, #tpu.memory_space<vmem>>, %arg3: memref<32x512xf32, #tpu.memory_space<vmem>>, %arg4: memref<256x32xf32, #tpu.memory_space<vmem>>, %arg5: memref<16x32xf32, #tpu.memory_space<vmem>>, %arg6: memref<16x32xf32, #tpu.memory_space<vmem>>) attributes {dimension_semantics = [#tpu.dimension_semantics<parallel>, #tpu.dimension_semantics<arbitrary>], iteration_bounds = array<i64: 1, 1>, scalar_prefetch = 0 : i64, scratch_operands = 1 : i64, tpu.core_type = #tpu.core_type<tc>, window_params = [{transform_indices = @transform_0, window_bounds = array<i64: 16, 32>}, {transform_indices = @transform_1, window_bounds = array<i64: 32, 512>}, {transform_indices = @transform_2, window_bounds = array<i64: 256, 32>}, {transform_indices = @transform_3, window_bounds = array<i64: 16, 32>}]} {
    %c0_i32 = arith.constant 0 : i32
    %0 = arith.cmpi eq, %arg1, %c0_i32 : i32
    %1 = arith.extui %0 : i1 to i32
    %c0_i32_0 = arith.constant 0 : i32
    %2 = arith.cmpi ne, %1, %c0_i32_0 : i32
    scf.if %2 {
      %cst_15 = arith.constant 0.000000e+00 : f32
      %24 = vector.broadcast %cst_15 : f32 to vector<16x32xf32>
      %c0_16 = arith.constant 0 : index
      %c0_17 = arith.constant 0 : index
      %25 = vector.load %arg6[%c0_16, %c0_17] : memref<16x32xf32, #tpu.memory_space<vmem>>, vector<16x32xf32>
      tpu.vector_store %arg6[%c0_16, %c0_17], %24 {strides = array<i32>} : memref<16x32xf32, #tpu.memory_space<vmem>>, vector<16x32xf32>,
    } else {
    }
    %c0 = arith.constant 0 : index
    %c0_1 = arith.constant 0 : index
    %3 = vector.load %arg2[%c0, %c0_1] : memref<16x32xf32, #tpu.memory_space<vmem>>, vector<16x32xf32>
    %c0_2 = arith.constant 0 : index
    %c0_3 = arith.constant 0 : index
    %4 = vector.load %arg3[%c0_2, %c0_3] : memref<32x512xf32, #tpu.memory_space<vmem>>, vector<32x512xf32>
    %cst = arith.constant dense<0.000000e+00> : vector<16x512xf32>
    %5 = tpu.matmul %3, %4, %cst {dimension_numbers = #tpu.dot_dimension_numbers<[1], [0], [0], [1], [0, 0, 1, 1], [], []>} : vector<16x32xf32>, vector<32x512xf32>, vector<16x512xf32> -> vector<16x512xf32>
    %6 = vector.extract_strided_slice %5 {offsets = [0, 0], sizes = [16, 256], strides = [1, 1]} : vector<16x512xf32> to vector<16x256xf32>
    %7 = vector.extract_strided_slice %5 {offsets = [0, 256], sizes = [16, 256], strides = [1, 1]} : vector<16x512xf32> to vector<16x256xf32>
    %cst_4 = arith.constant 0.000000e+00 : f32
    %8 = vector.broadcast %cst_4 : f32 to vector<16x256xf32>
    %9 = arith.subf %8, %6 : vector<16x256xf32>
    %10 = math.exp %9 : vector<16x256xf32>
    %cst_5 = arith.constant 1.000000e+00 : f32
    %11 = vector.broadcast %cst_5 : f32 to vector<16x256xf32>
    %12 = arith.addf %11, %10 : vector<16x256xf32>
    %13 = tpu.reciprocal %12 {approx = true} : vector<16x256xf32> -> vector<16x256xf32>
    %14 = arith.mulf %6, %13 : vector<16x256xf32>
    %15 = arith.mulf %14, %7 : vector<16x256xf32>
    %c0_6 = arith.constant 0 : index
    %c0_7 = arith.constant 0 : index
    %16 = vector.load %arg6[%c0_6, %c0_7] : memref<16x32xf32, #tpu.memory_space<vmem>>, vector<16x32xf32>
    %c0_8 = arith.constant 0 : index
    %c0_9 = arith.constant 0 : index
    %17 = vector.load %arg4[%c0_8, %c0_9] : memref<256x32xf32, #tpu.memory_space<vmem>>, vector<256x32xf32>
    %cst_10 = arith.constant dense<0.000000e+00> : vector<16x32xf32>
    %18 = tpu.matmul %15, %17, %cst_10 {dimension_numbers = #tpu.dot_dimension_numbers<[1], [0], [0], [1], [0, 0, 1, 1], [], []>} : vector<16x256xf32>, vector<256x32xf32>, vector<16x32xf32> -> vector<16x32xf32>
    %19 = arith.addf %16, %18 : vector<16x32xf32>
    %c0_11 = arith.constant 0 : index
    %c0_12 = arith.constant 0 : index
    %20 = vector.load %arg6[%c0_11, %c0_12] : memref<16x32xf32, #tpu.memory_space<vmem>>, vector<16x32xf32>
    tpu.vector_store %arg6[%c0_11, %c0_12], %19 {strides = array<i32>} : memref<16x32xf32, #tpu.memory_space<vmem>>, vector<16x32xf32>,
    %c0_i32_13 = arith.constant 0 : i32
    %21 = arith.cmpi eq, %arg1, %c0_i32_13 : i32
    %22 = arith.extui %21 : i1 to i32
    %c0_i32_14 = arith.constant 0 : i32
    %23 = arith.cmpi ne, %22, %c0_i32_14 : i32
    scf.if %23 {
      %c0_15 = arith.constant 0 : index
      %c0_16 = arith.constant 0 : index
      %24 = vector.load %arg6[%c0_15, %c0_16] : memref<16x32xf32, #tpu.memory_space<vmem>>, vector<16x32xf32>
      %c0_17 = arith.constant 0 : index
      %c0_18 = arith.constant 0 : index
      %25 = vector.load %arg5[%c0_17, %c0_18] : memref<16x32xf32, #tpu.memory_space<vmem>>, vector<16x32xf32>
      tpu.vector_store %arg5[%c0_17, %c0_18], %24 {strides = array<i32>} : memref<16x32xf32, #tpu.memory_space<vmem>>, vector<16x32xf32>,
    } else {
    }
    return
  }
  func.func @transform_0(%arg0: i32, %arg1: i32) -> (i32, i32) {
    %c0_i32 = arith.constant 0 : i32
    %c0_i32_0 = arith.constant 0 : i32
    return %arg0, %c0_i32 : i32, i32
  }
  func.func @transform_1(%arg0: i32, %arg1: i32) -> (i32, i32) {
    %c0_i32 = arith.constant 0 : i32
    %c0_i32_0 = arith.constant 0 : i32
    return %c0_i32, %arg1 : i32, i32
  }
  func.func @transform_2(%arg0: i32, %arg1: i32) -> (i32, i32) {
    %c0_i32 = arith.constant 0 : i32
    %c0_i32_0 = arith.constant 0 : i32
    return %arg1, %c0_i32 : i32, i32
  }
  func.func @transform_3(%arg0: i32, %arg1: i32) -> (i32, i32) {
    %c0_i32 = arith.constant 0 : i32
    %c0_i32_0 = arith.constant 0 : i32
    return %arg0, %c0_i32 : i32, i32
  }
}

</mosaic_0001>

<llo_original>
// kernel: fused_llama_mlp_packed.1
$region0: #{fused_llama_mlp_packed.1}
  #allocation0 [shape = 'u32[]', space=smem, size = 0x4, offset = 0x4, fixed_abs, tag = 'smem constant byte address 0x4 - core index']
  #allocation1 [shape = 'u32[144,128]{1,0:T(1,128)}', space=vmem, size = 0x12000, scoped, tag = 'internal scratch']
  #allocation2 [shape = 'f32[16,32]{1,0:T(8,128)}', space=vmem, size = 0x2000, scoped, tag = 'scratch operand']
  %s0 = inlined_call_operand.vmem [shape: f32[16,32], index: 0, kind: input, shape index: {}]
  %s1 = inlined_call_operand.vmem [shape: f32[32,512], index: 1, kind: input, shape index: {}]
  %s2 = inlined_call_operand.vmem [shape: f32[256,32], index: 2, kind: input, shape index: {}]
  %s3 = inlined_call_operand.hbm [shape: f32[16,32], index: 3, kind: output, shape index: {}]
  %s4 = sld [smem:[#allocation0]]
  $region30: #{fused_llama_mlp_packed.1} parent=0
    _
  %s6 = ssub.s32 1, %s4
  %s7 = scalar_select 0, %s6, %s4
  $region1: #{fused_llama_mlp_packed.1} parent=0
    #allocation3 [shape = 'u8[8192]{0}', space=vmem, size = 0x2000, scoped, tag = 'output window, operand 0, single buffered']
    #allocation4 [shape = 's32[1]{0}', space=sflag, size = 0x4, scoped, tag = 'scoped memory for fused_llama_mlp_packed.1']
    %8 = vsyncpa [#allocation4], 0
    // Predicated region
    $region2: #{fused_llama_mlp_packed.1} parent=1 // pred_check
      _
    $region3: #{fused_llama_mlp_packed.1} parent=1 // pred_check_branch
      %10 = sbr.rel (0) target = $region5
    $region4: #{fused_llama_mlp_packed.1} parent=1 // pred_region
      _
    $region5: #{fused_llama_mlp_packed.1} parent=1 // pred_fallthru
      _
    // Predicated region
    $region6: #{fused_llama_mlp_packed.1} parent=1 // pred_check
      _
    $region7: #{fused_llama_mlp_packed.1} parent=1 // pred_check_branch
      %12 = sbr.rel (0) target = $region9
    $region8: #{fused_llama_mlp_packed.1} parent=1 // pred_region
      _
    $region9: #{fused_llama_mlp_packed.1} parent=1 // pred_fallthru
      _
    // Predicated region
    $region10: #{fused_llama_mlp_packed.1} parent=1 // pred_check
      _
    $region11: #{fused_llama_mlp_packed.1} parent=1 // pred_check_branch
      %14 = sbr.rel (0) target = $region13
    $region12: #{fused_llama_mlp_packed.1} parent=1 // pred_region
      _
    $region13: #{fused_llama_mlp_packed.1} parent=1 // pred_fallthru
      _
    %p15 = scmp.eq.s32.totalorder 0, 0
    // Predicated region
    $region14: #{fused_llama_mlp_packed.1} parent=1 // pred_check
      %p16 = pneg %p15
    $region15: #{fused_llama_mlp_packed.1} parent=1 // pred_check_branch
      %18 = sbr.rel (%p16) target = $region17
    $region16: #{fused_llama_mlp_packed.1} parent=1 // pred_region
      %vm19 = vcmask 261120
      %20 = vst.msk [vmem:[#allocation2] sm:$0xff] %vm19, 0.0
      %21 = vst.msk [vmem:[#allocation2 + $0x8] sm:$0xff] %vm19, 0.0
    $region17: #{fused_llama_mlp_packed.1} parent=1 // pred_fallthru
      _
    %v22 = vld [vmem:[%s0] sm:$0xff]
    %v23 = vld [vmem:[%s0 + $0x8] sm:$0xff]
    %v24 = vld [vmem:[%s1] sm:$0xff]
    %v25 = vld [vmem:[%s1 + $0x8] sm:$0xff]
    %v26 = vld [vmem:[%s1 + $0x10] sm:$0xff]
    %v27 = vld [vmem:[%s1 + $0x18] sm:$0xff]
    %v28 = vld [vmem:[%s1 + $0x20] sm:$0xff]
    %v29 = vld [vmem:[%s1 + $0x28] sm:$0xff]
    %v30 = vld [vmem:[%s1 + $0x30] sm:$0xff]
    %v31 = vld [vmem:[%s1 + $0x38] sm:$0xff]
    %v32 = vld [vmem:[%s1 + $0x40] sm:$0xff]
    %v33 = vld [vmem:[%s1 + $0x48] sm:$0xff]
    %v34 = vld [vmem:[%s1 + $0x50] sm:$0xff]
    %v35 = vld [vmem:[%s1 + $0x58] sm:$0xff]
    %v36 = vld [vmem:[%s1 + $0x60] sm:$0xff]
    %v37 = vld [vmem:[%s1 + $0x68] sm:$0xff]
    %v38 = vld [vmem:[%s1 + $0x70] sm:$0xff]
    %v39 = vld [vmem:[%s1 + $0x78] sm:$0xff]
    %vm40 = vcmask 261120
    %v42 = vsel %vm40, %v22, 0
    %v45 = vsel %vm40, %v23, 0
    %47 = vmatprep.subr.mxu0 %v25
    %48 = vmatpush1.msra.mxu0 %v24
    %49 = vmatprep.subr.mxu0 %v29
    %50 = vmatpush1.msra.mxu0 %v28
    %51 = vmatprep.subr.mxu0 %v33
    %52 = vmatpush1.msra.mxu0 %v32
    %53 = vmatprep.subr.mxu0 %v37
    %54 = vmatpush1.msra.mxu0 %v36
    %55 = vmatprep.subr.mxu0 0.0
    %56 = vmatpush1.msra.mxu0 0.0
    %57 = vmatprep.subr.mxu0 0.0
    %58 = vmatpush1.msra.mxu0 0.0
    %59 = vmatprep.subr.mxu0 0.0
    %60 = vmatpush1.msra.mxu0 0.0
    %61 = vmatprep.subr.mxu0 0.0
    %62 = vmatpush1.msra.mxu0 0.0
    %63 = vmatprep.subr.mxu0 0.0
    %64 = vmatpush1.msra.mxu0 0.0
    %65 = vmatprep.subr.mxu0 0.0
    %66 = vmatpush1.msra.mxu0 0.0
    %67 = vmatprep.subr.mxu0 0.0
    %68 = vmatpush1.msra.mxu0 0.0
    %69 = vmatprep.subr.mxu0 0.0
    %70 = vmatpush1.msra.mxu0 0.0
    %71 = vmatprep.subr.mxu0 0.0
    %72 = vmatpush1.msra.mxu0 0.0
    %73 = vmatprep.subr.mxu0 0.0
    %74 = vmatpush1.msra.mxu0 0.0
    %75 = vmatprep.subr.mxu0 0.0
    %76 = vmatpush1.msra.mxu0 0.0
    %77 = vmatprep.subr.mxu0 0.0
    %78 = vmatpush1.msra.mxu0 0.0
    %79 = vmatprep.subr.mxu0 0.0
    %80 = vmatpush1.msra.mxu0 0.0
    %81 = vmatprep.subr.mxu0 0.0
    %82 = vmatpush1.msra.mxu0 0.0
    %83 = vmatprep.subr.mxu0 0.0
    %84 = vmatpush1.msra.mxu0 0.0
    %85 = vmatprep.subr.mxu0 0.0
    %86 = vmatpush1.msra.mxu0 0.0
    %87 = vmatprep.subr.mxu0 0.0
    %88 = vmatpush1.msra.mxu0 0.0
    %89 = vmatprep.subr.mxu0 0.0
    %90 = vmatpush1.msra.mxu0 0.0
    %91 = vmatprep.subr.mxu0 0.0
    %92 = vmatpush1.msra.mxu0 0.0
    %93 = vmatprep.subr.mxu0 0.0
    %94 = vmatpush1.msra.mxu0 0.0
    %95 = vmatprep.subr.mxu0 0.0
    %96 = vmatpush1.msra.mxu0 0.0
    %97 = vmatprep.subr.mxu0 0.0
    %98 = vmatpush1.msra.mxu0 0.0
    %99 = vmatprep.subr.mxu0 0.0
    %100 = vmatpush1.msra.mxu0 0.0
    %101 = vmatprep.subr.mxu0 0.0
    %102 = vmatpush1.msra.mxu0 0.0
    %103 = vmatprep.subr.mxu0 0.0
    %104 = vmatpush1.msra.mxu0 0.0
    %105 = vmatprep.subr.mxu0 0.0
    %106 = vmatpush1.msra.mxu0 0.0
    %107 = vmatprep.subr.mxu0 0.0
    %108 = vmatpush1.msra.mxu0 0.0
    %109 = vmatprep.subr.mxu0 0.0
    %110 = vmatpush1.msra.mxu0 0.0
    %111 = vmatprep.mubr.f32.mxu0 0.0
    %112 = vmatmul.mubr.f32.gmra.mrb[0].mxu0 %v42
    %v113 = vpop.f32.mrb[0].mxu0
    %v114 = vadd.f32 0.0, %v113
    %v115 = vpop.f32.mrb[0].mxu0
    %v116 = vadd.f32 0.0, %v115
    %117 = vmatprep.mubr.f32.mxu0 0.0
    %118 = vmatmul.mubr.f32.gmra.mrb[0].mxu0 %v45
    %v119 = vpop.f32.mrb[0].mxu0
    %v120 = vadd.f32 0.0, %v119
    %v121 = vpop.f32.mrb[0].mxu0
    %v122 = vadd.f32 0.0, %v121
    %123 = vdwg.mxu0
    %124 = vmatprep.subr.mxu0 %v27
    %125 = vmatpush1.msra.mxu0 %v26
    %126 = vmatprep.subr.mxu0 %v31
    %127 = vmatpush1.msra.mxu0 %v30
    %128 = vmatprep.subr.mxu0 %v35
    %129 = vmatpush1.msra.mxu0 %v34
    %130 = vmatprep.subr.mxu0 %v39
    %131 = vmatpush1.msra.mxu0 %v38
    %132 = vmatprep.subr.mxu0 0.0
    %133 = vmatpush1.msra.mxu0 0.0
    %134 = vmatprep.subr.mxu0 0.0
    %135 = vmatpush1.msra.mxu0 0.0
    %136 = vmatprep.subr.mxu0 0.0
    %137 = vmatpush1.msra.mxu0 0.0
    %138 = vmatprep.subr.mxu0 0.0
    %139 = vmatpush1.msra.mxu0 0.0
    %140 = vmatprep.subr.mxu0 0.0
    %141 = vmatpush1.msra.mxu0 0.0
    %142 = vmatprep.subr.mxu0 0.0
    %143 = vmatpush1.msra.mxu0 0.0
    %144 = vmatprep.subr.mxu0 0.0
    %145 = vmatpush1.msra.mxu0 0.0
    %146 = vmatprep.subr.mxu0 0.0
    %147 = vmatpush1.msra.mxu0 0.0
    %148 = vmatprep.subr.mxu0 0.0
    %149 = vmatpush1.msra.mxu0 0.0
    %150 = vmatprep.subr.mxu0 0.0
    %151 = vmatpush1.msra.mxu0 0.0
    %152 = vmatprep.subr.mxu0 0.0
    %153 = vmatpush1.msra.mxu0 0.0
    %154 = vmatprep.subr.mxu0 0.0
    %155 = vmatpush1.msra.mxu0 0.0
    %156 = vmatprep.subr.mxu0 0.0
    %157 = vmatpush1.msra.mxu0 0.0
    %158 = vmatprep.subr.mxu0 0.0
    %159 = vmatpush1.msra.mxu0 0.0
    %160 = vmatprep.subr.mxu0 0.0
    %161 = vmatpush1.msra.mxu0 0.0
    %162 = vmatprep.subr.mxu0 0.0
    %163 = vmatpush1.msra.mxu0 0.0
    %164 = vmatprep.subr.mxu0 0.0
    %165 = vmatpush1.msra.mxu0 0.0
    %166 = vmatprep.subr.mxu0 0.0
    %167 = vmatpush1.msra.mxu0 0.0
    %168 = vmatprep.subr.mxu0 0.0
    %169 = vmatpush1.msra.mxu0 0.0
    %170 = vmatprep.subr.mxu0 0.0
    %171 = vmatpush1.msra.mxu0 0.0
    %172 = vmatprep.subr.mxu0 0.0
    %173 = vmatpush1.msra.mxu0 0.0
    %174 = vmatprep.subr.mxu0 0.0
    %175 = vmatpush1.msra.mxu0 0.0
    %176 = vmatprep.subr.mxu0 0.0
    %177 = vmatpush1.msra.mxu0 0.0
    %178 = vmatprep.subr.mxu0 0.0
    %179 = vmatpush1.msra.mxu0 0.0
    %180 = vmatprep.subr.mxu0 0.0
    %181 = vmatpush1.msra.mxu0 0.0
    %182 = vmatprep.subr.mxu0 0.0
    %183 = vmatpush1.msra.mxu0 0.0
    %184 = vmatprep.subr.mxu0 0.0
    %185 = vmatpush1.msra.mxu0 0.0
    %186 = vmatprep.subr.mxu0 0.0
    %187 = vmatpush1.msra.mxu0 0.0
    %188 = vmatprep.mubr.f32.mxu0 0.0
    %189 = vmatmul.mubr.f32.gmra.mrb[0].mxu0 %v42
    %v190 = vpop.f32.mrb[0].mxu0
    %v191 = vadd.f32 0.0, %v190
    %v192 = vpop.f32.mrb[0].mxu0
    %v193 = vadd.f32 0.0, %v192
    %194 = vmatprep.mubr.f32.mxu0 0.0
    %195 = vmatmul.mubr.f32.gmra.mrb[0].mxu0 %v45
    %v196 = vpop.f32.mrb[0].mxu0
    %v197 = vadd.f32 0.0, %v196
    %v198 = vpop.f32.mrb[0].mxu0
    %v199 = vadd.f32 0.0, %v198
    %200 = vdwg.mxu0
    %v201 = vsub.f32 0.0, %v114
    %v202 = vsub.f32 0.0, %v116
    %v203 = vsub.f32 0.0, %v120
    %v204 = vsub.f32 0.0, %v122
    %v205 = vmul.f32 %v201, 1.442695
    %v206 = vpow.pop %v205
    %v207 = vmul.f32 %v202, 1.442695
    %v208 = vpow.pop %v207
    %v209 = vmul.f32 %v203, 1.442695
    %v210 = vpow.pop %v209
    %v211 = vmul.f32 %v204, 1.442695
    %v212 = vpow.pop %v211
    %v213 = vadd.f32 %v206, 1.0
    %v214 = vadd.f32 %v208, 1.0
    %v215 = vadd.f32 %v210, 1.0
    %v216 = vadd.f32 %v212, 1.0
    %v217 = vrcp.pop %v213
    %v218 = vrcp.pop %v214
    %v219 = vrcp.pop %v215
    %v220 = vrcp.pop %v216
    %v221 = vmul.f32 %v114, %v217
    %v222 = vmul.f32 %v116, %v218
    %v223 = vmul.f32 %v120, %v219
    %v224 = vmul.f32 %v122, %v220
    %v225 = vmul.f32 %v221, %v191
    %v226 = vmul.f32 %v222, %v193
    %v227 = vmul.f32 %v223, %v197
    %v228 = vmul.f32 %v224, %v199
    %v229 = vld [vmem:[#allocation2] sm:$0xff]
    %v230 = vld [vmem:[#allocation2 + $0x8] sm:$0xff]
    %v231 = vld [vmem:[%s2] sm:$0xff]
    %v232 = vld [vmem:[%s2 + $0x8] sm:$0xff]
    %v233 = vld [vmem:[%s2 + $0x10] sm:$0xff]
    %v234 = vld [vmem:[%s2 + $0x18] sm:$0xff]
    %v235 = vld [vmem:[%s2 + $0x20] sm:$0xff]
    %v236 = vld [vmem:[%s2 + $0x28] sm:$0xff]
    %v237 = vld [vmem:[%s2 + $0x30] sm:$0xff]
    %v238 = vld [vmem:[%s2 + $0x38] sm:$0xff]
    %v239 = vld [vmem:[%s2 + $0x40] sm:$0xff]
    %v240 = vld [vmem:[%s2 + $0x48] sm:$0xff]
    %v241 = vld [vmem:[%s2 + $0x50] sm:$0xff]
    %v242 = vld [vmem:[%s2 + $0x58] sm:$0xff]
    %v243 = vld [vmem:[%s2 + $0x60] sm:$0xff]
    %v244 = vld [vmem:[%s2 + $0x68] sm:$0xff]
    %v245 = vld [vmem:[%s2 + $0x70] sm:$0xff]
    %v246 = vld [vmem:[%s2 + $0x78] sm:$0xff]
    %v247 = vld [vmem:[%s2 + $0x80] sm:$0xff]
    %v248 = vld [vmem:[%s2 + $0x88] sm:$0xff]
    %v249 = vld [vmem:[%s2 + $0x90] sm:$0xff]
    %v250 = vld [vmem:[%s2 + $0x98] sm:$0xff]
    %v251 = vld [vmem:[%s2 + $0xa0] sm:$0xff]
    %v252 = vld [vmem:[%s2 + $0xa8] sm:$0xff]
    %v253 = vld [vmem:[%s2 + $0xb0] sm:$0xff]
    %v254 = vld [vmem:[%s2 + $0xb8] sm:$0xff]
    %v255 = vld [vmem:[%s2 + $0xc0] sm:$0xff]
    %v256 = vld [vmem:[%s2 + $0xc8] sm:$0xff]
    %v257 = vld [vmem:[%s2 + $0xd0] sm:$0xff]
    %v258 = vld [vmem:[%s2 + $0xd8] sm:$0xff]
    %v259 = vld [vmem:[%s2 + $0xe0] sm:$0xff]
    %v260 = vld [vmem:[%s2 + $0xe8] sm:$0xff]
    %v261 = vld [vmem:[%s2 + $0xf0] sm:$0xff]
    %v262 = vld [vmem:[%s2 + $0xf8] sm:$0xff]
    %263 = vmatprep.subr.mxu0 0.0
    %264 = vmatpush1.msra.mxu0 %v231
    %265 = vmatprep.subr.mxu0 0.0
    %266 = vmatpush1.msra.mxu0 %v232
    %267 = vmatprep.subr.mxu0 0.0
    %268 = vmatpush1.msra.mxu0 %v233
    %269 = vmatprep.subr.mxu0 0.0
    %270 = vmatpush1.msra.mxu0 %v234
    %271 = vmatprep.subr.mxu0 0.0
    %272 = vmatpush1.msra.mxu0 %v235
    %273 = vmatprep.subr.mxu0 0.0
    %274 = vmatpush1.msra.mxu0 %v236
    %275 = vmatprep.subr.mxu0 0.0
    %276 = vmatpush1.msra.mxu0 %v237
    %277 = vmatprep.subr.mxu0 0.0
    %278 = vmatpush1.msra.mxu0 %v238
    %279 = vmatprep.subr.mxu0 0.0
    %280 = vmatpush1.msra.mxu0 %v239
    %281 = vmatprep.subr.mxu0 0.0
    %282 = vmatpush1.msra.mxu0 %v240
    %283 = vmatprep.subr.mxu0 0.0
    %284 = vmatpush1.msra.mxu0 %v241
    %285 = vmatprep.subr.mxu0 0.0
    %286 = vmatpush1.msra.mxu0 %v242
    %287 = vmatprep.subr.mxu0 0.0
    %288 = vmatpush1.msra.mxu0 %v243
    %289 = vmatprep.subr.mxu0 0.0
    %290 = vmatpush1.msra.mxu0 %v244
    %291 = vmatprep.subr.mxu0 0.0
    %292 = vmatpush1.msra.mxu0 %v245
    %293 = vmatprep.subr.mxu0 0.0
    %294 = vmatpush1.msra.mxu0 %v246
    %295 = vmatprep.subr.mxu0 0.0
    %296 = vmatpush1.msra.mxu0 %v247
    %297 = vmatprep.subr.mxu0 0.0
    %298 = vmatpush1.msra.mxu0 %v248
    %299 = vmatprep.subr.mxu0 0.0
    %300 = vmatpush1.msra.mxu0 %v249
    %301 = vmatprep.subr.mxu0 0.0
    %302 = vmatpush1.msra.mxu0 %v250
    %303 = vmatprep.subr.mxu0 0.0
    %304 = vmatpush1.msra.mxu0 %v251
    %305 = vmatprep.subr.mxu0 0.0
    %306 = vmatpush1.msra.mxu0 %v252
    %307 = vmatprep.subr.mxu0 0.0
    %308 = vmatpush1.msra.mxu0 %v253
    %309 = vmatprep.subr.mxu0 0.0
    %310 = vmatpush1.msra.mxu0 %v254
    %311 = vmatprep.subr.mxu0 0.0
    %312 = vmatpush1.msra.mxu0 %v255
    %313 = vmatprep.subr.mxu0 0.0
    %314 = vmatpush1.msra.mxu0 %v256
    %315 = vmatprep.subr.mxu0 0.0
    %316 = vmatpush1.msra.mxu0 %v257
    %317 = vmatprep.subr.mxu0 0.0
    %318 = vmatpush1.msra.mxu0 %v258
    %319 = vmatprep.subr.mxu0 0.0
    %320 = vmatpush1.msra.mxu0 %v259
    %321 = vmatprep.subr.mxu0 0.0
    %322 = vmatpush1.msra.mxu0 %v260
    %323 = vmatprep.subr.mxu0 0.0
    %324 = vmatpush1.msra.mxu0 %v261
    %325 = vmatprep.subr.mxu0 0.0
    %326 = vmatpush1.msra.mxu0 %v262
    %327 = vmatprep.mubr.f32.mxu0 %v226
    %328 = vmatmul.mubr.f32.gmra.mrb[0].mxu0 %v225
    %v329 = vpop.f32.mrb[0].mxu0
    %v330 = vadd.f32 0.0, %v329
    %v331 = vpop.f32.mrb[0].mxu0
    %332 = vmatprep.mubr.f32.mxu0 %v228
    %333 = vmatmul.mubr.f32.gmra.mrb[0].mxu0 %v227
    %v334 = vpop.f32.mrb[0].mxu0
    %v335 = vadd.f32 0.0, %v334
    %v336 = vpop.f32.mrb[0].mxu0
    %337 = vdwg.mxu0
    %v338 = vadd.f32 %v229, %v330
    %v339 = vadd.f32 %v230, %v335
    %340 = vst.msk [vmem:[#allocation2] sm:$0xff] %vm40, %v338
    %341 = vst.msk [vmem:[#allocation2 + $0x8] sm:$0xff] %vm40, %v339
    // Predicated region
    $region18: #{fused_llama_mlp_packed.1} parent=1 // pred_check
      %p342 = pneg %p15
    $region19: #{fused_llama_mlp_packed.1} parent=1 // pred_check_branch
      %344 = sbr.rel (%p342) target = $region21
    $region20: #{fused_llama_mlp_packed.1} parent=1 // pred_region
      %v345 = vld [vmem:[#allocation2] sm:$0xff]
      %v346 = vld [vmem:[#allocation2 + $0x8] sm:$0xff]
      %347 = vst.msk [vmem:[#allocation3] sm:$0xff] %vm40, %v345
      %348 = vst.msk [vmem:[#allocation3 + $0x8] sm:$0xff] %vm40, %v346
    $region21: #{fused_llama_mlp_packed.1} parent=1 // pred_fallthru
      _
    // Predicated region
    $region22: #{fused_llama_mlp_packed.1} parent=1 // pred_check
      _
    $region23: #{fused_llama_mlp_packed.1} parent=1 // pred_check_branch
      %350 = sbr.rel (0) target = $region25
    $region24: #{fused_llama_mlp_packed.1} parent=1 // pred_region
      %s352 = ssub.s32 256, 256
      %353 = vsyncadd [#allocation4], %s352
      %s354 = sshll.u32 [#allocation3], 4
      %s355 = int_to_ptr.vmem [resolvable:$true] %s354
      %360 = dma.vmem_to_hbm [thread:$0]  %s355, 256, %s3, [#allocation4], 128, 128, 8
    $region25: #{fused_llama_mlp_packed.1} parent=1 // pred_fallthru
      _
    // Predicated region
    $region26: #{fused_llama_mlp_packed.1} parent=1 // pred_check
      _
    $region27: #{fused_llama_mlp_packed.1} parent=1 // pred_check_branch
      %362 = sbr.rel (0) target = $region29
    $region28: #{fused_llama_mlp_packed.1} parent=1 // pred_region
      %363 = dma.done [#allocation4], 256
    $region29: #{fused_llama_mlp_packed.1} parent=1 // pred_fallthru
      _
    %364 = vsyncpa [#allocation4], 1

</llo_original>
